<compile_context>
chip_gen: v6e
topology: v6e:2x2x1
jax: 0.10.0
libtpu: 0.0.40
codegen_flags: <defaults>
</compile_context>

<pallas_src>
import math
import functools

import jax
import jax.numpy as jnp
from jax import lax
from jax.experimental import pallas as pl
from jax.experimental.pallas import tpu as pltpu


_LOG2E = 1.4426950408889634

# Double-buffered block budget: leaves headroom inside v7x's 32 MiB scoped /
# 64 MiB physical per-TC VMEM; v5e/v6e (128 MiB physical) are looser.
_VMEM_BLOCK_BUDGET = 24 * 1024 * 1024

_TM_CAND = (1024, 512, 256, 128, 64, 32, 16, 8)
_TN_CAND = (1024, 512, 384, 256, 128)
_TK_CAND = (512, 256, 128)


def _vmem_limit_bytes(footprint):
    # Explicit scoped-VMEM limit: above v5e's 16 MiB default, below v7x's
    # 64 MiB physical per-TC capacity.
    return int(min(56 * 1024 * 1024,
                   max(32 * 1024 * 1024, footprint + 16 * 1024 * 1024)))


def _divisor_tiles(dim, candidates):
    ts = [t for t in candidates if t <= dim and dim % t == 0]
    return ts if ts else [dim]          # awkward shapes: fall back to the full dim


def _largest_divisor_leq(n, cap):
    for t in range(min(cap, n), 0, -1):
        if n % t == 0:
            return t
    return 1


# --------------------------------------------------------------------------
# Kernel 1a: weight-resident fused linear  out = x @ W + b   (full-K blocks)
#   grid = (N/tn, M/tm); the W stripe's block index depends only on the outer
#   axis, so it stays VMEM-resident across the inner M sweep (streamed from
#   HBM exactly once per stripe). No K axis -> no accumulator scratch.
# --------------------------------------------------------------------------
def _linear_wres_kernel(x_ref, w_ref, b_ref, o_ref):
    o_ref[...] = (jnp.dot(x_ref[...], w_ref[...],
                          preferred_element_type=jnp.float32)
                  + b_ref[...]).astype(o_ref.dtype)


# --------------------------------------------------------------------------
# Kernel 1b: K-tiled fused linear (fallback for very large K)
#   grid = (M/tm, N/tn, K/tk); K is the reduction ("arbitrary") axis with a
#   float32 VMEM accumulator; bias add + downcast happen in the finalize step.
# --------------------------------------------------------------------------
def _linear_ktiled_kernel(x_ref, w_ref, b_ref, o_ref, acc_ref):
    @pl.when(pl.program_id(2) == 0)
    def _init():
        acc_ref[...] = jnp.zeros_like(acc_ref)

    acc_ref[...] += jnp.dot(x_ref[...], w_ref[...],
                            preferred_element_type=jnp.float32)

    @pl.when(pl.program_id(2) == pl.num_programs(2) - 1)
    def _finalize():
        o_ref[...] = (acc_ref[...] + b_ref[...]).astype(o_ref.dtype)


def linear(x, w, bias, *, out_dtype=None, compute_dtype=jnp.bfloat16,
           force_k_tiled=False):
    M, K = x.shape
    K2, N = w.shape
    assert K == K2 and bias.shape == (N,)
    out_dtype = out_dtype if out_dtype is not None else x.dtype

    # bf16 MXU operands by default (f32 accumulation inside the kernel).
    if compute_dtype is not None:
        x = x.astype(compute_dtype)
        w = w.astype(compute_dtype)
    b2 = bias.astype(jnp.float32).reshape(1, N)

    isz = x.dtype.itemsize
    osz = jnp.dtype(out_dtype).itemsize

    # ---------------- weight-resident (full-K) path ----------------
    def fp_wres(tm, tn):
        return 2 * (tm * K + K * tn + tn) * isz + 2 * tm * tn * osz

    if not force_k_tiled:
        cfgs = [(tm, tn)
                for tm in _divisor_tiles(M, _TM_CAND)
                for tn in _divisor_tiles(N, _TN_CAND)]
        # Prefer wide N stripes (fewer X re-streams), then tall M tiles.
        cfgs.sort(key=lambda c: (c[1], c[0]), reverse=True)
        pick = next((c for c in cfgs if fp_wres(*c) <= _VMEM_BLOCK_BUDGET), None)
        if pick is not None:
            tm, tn = pick
            fp = fp_wres(tm, tn)
            cost = pl.CostEstimate(
                flops=2 * M * N * K, transcendentals=0,
                bytes_accessed=(M * K * isz * (N // tn)   # X re-streamed per stripe
                                + K * N * isz             # W streamed once
                                + N * 4 + M * N * osz))
            return pl.pallas_call(
                _linear_wres_kernel,
                out_shape=jax.ShapeDtypeStruct((M, N), out_dtype),
                grid_spec=pltpu.PrefetchScalarGridSpec(
                    num_scalar_prefetch=0,
                    grid=(N // tn, M // tm),        # M innermost: W stripe resident
                    in_specs=[
                        pl.BlockSpec((tm, K), lambda j, i: (i, 0)),
                        pl.BlockSpec((K, tn), lambda j, i: (0, j)),
                        pl.BlockSpec((1, tn), lambda j, i: (0, j)),
                    ],
                    out_specs=pl.BlockSpec((tm, tn), lambda j, i: (i, j)),
                ),
                compiler_params=pltpu.CompilerParams(
                    dimension_semantics=("parallel", "parallel"),
                    vmem_limit_bytes=_vmem_limit_bytes(fp)),
                cost_estimate=cost,
            )(x, w, b2)

    # ---------------- K-tiled fallback (large K) ----------------
    def fp_tiled(tm, tn, tk):
        return (2 * (tm * tk + tk * tn + tn) * isz
                + 2 * tm * tn * osz + tm * tn * 4)

    cfgs = [(tm, tn, tk)
            for tm in _divisor_tiles(M, _TM_CAND)
            for tn in _divisor_tiles(N, _TN_CAND)
            for tk in _divisor_tiles(K, _TK_CAND)]
    # Prefer big output tiles (arithmetic intensity), then big K tiles.
    cfgs.sort(key=lambda c: (c[0] * c[1], c[2]), reverse=True)
    tm, tn, tk = next((c for c in cfgs if fp_tiled(*c) <= _VMEM_BLOCK_BUDGET),
                      cfgs[-1])
    fp = fp_tiled(tm, tn, tk)

    cost = pl.CostEstimate(
        flops=2 * M * N * K, transcendentals=0,
        bytes_accessed=(M * K * isz * (N // tn)
                        + K * N * isz * (M // tm)
                        + N * 4 + M * N * osz))

    return pl.pallas_call(
        _linear_ktiled_kernel,
        out_shape=jax.ShapeDtypeStruct((M, N), out_dtype),
        grid_spec=pltpu.PrefetchScalarGridSpec(
            num_scalar_prefetch=0,
            grid=(M // tm, N // tn, K // tk),
            in_specs=[
                pl.BlockSpec((tm, tk), lambda i, j, k: (i, k)),
                pl.BlockSpec((tk, tn), lambda i, j, k: (k, j)),
                pl.BlockSpec((1, tn), lambda i, j, k: (0, j)),
            ],
            out_specs=pl.BlockSpec((tm, tn), lambda i, j, k: (i, j)),
            scratch_shapes=[pltpu.VMEM((tm, tn), jnp.float32)],
        ),
        compiler_params=pltpu.CompilerParams(
            dimension_semantics=("parallel", "parallel", "arbitrary"),
            vmem_limit_bytes=_vmem_limit_bytes(fp)),
        cost_estimate=cost,
    )(x, w, b2)


# --------------------------------------------------------------------------
# Kernel 2: flash-style attention core.
#   q,k,v: [B*nh, S, hd].  grid = (head_groups, q_tiles, kv_tiles); kv is the
#   innermost "arbitrary" axis with online-softmax m/l/acc scratch in VMEM.
#   No S x S score matrix is ever materialized.  The softmax scale and log2(e)
#   are folded into Q (hd-sized multiply instead of two tkv-sized ones) and
#   exp -> exp2 so the EUP sees the native op.
# --------------------------------------------------------------------------
def _flash_attn_kernel(q_ref, k_ref, v_ref, o_ref, m_ref, l_ref, acc_ref, *,
                       scale_log2e):
    kv = pl.program_id(2)

    @pl.when(kv == 0)
    def _init():
        m_ref[...] = jnp.full_like(m_ref, -jnp.inf)
        l_ref[...] = jnp.zeros_like(l_ref)
        acc_ref[...] = jnp.zeros_like(acc_ref)

    q = q_ref[...] * scale_log2e    # fold 1/sqrt(hd) and log2(e) into Q
    k = k_ref[...]                  # [G, tkv, D]
    v = v_ref[...]                  # [G, tkv, D]

    # Q K^T contracting last axes (no explicit transpose of K), f32 accumulate.
    # Scores live in the log2 domain (scale*log2e already applied).
    s = lax.dot_general(q, k, (((2,), (2,)), ((0,), (0,))),
                        preferred_element_type=jnp.float32)   # [G, tq, tkv]

    m_prev = m_ref[...]
    m_new = jnp.maximum(m_prev, jnp.max(s, axis=-1, keepdims=True))
    alpha = jnp.exp2(m_prev - m_new)               # rescale of previous stats
    p = jnp.exp2(s - m_new)                        # f32 softmax numerator
    l_ref[...] = alpha * l_ref[...] + jnp.sum(p, axis=-1, keepdims=True)

    pv = lax.dot_general(p.astype(v.dtype), v, (((2,), (1,)), ((0,), (0,))),
                         preferred_element_type=jnp.float32)  # [G, tq, D]
    acc_ref[...] = alpha * acc_ref[...] + pv
    m_ref[...] = m_new

    @pl.when(kv == pl.num_programs(2) - 1)
    def _finalize():
        # approx reciprocal (EUP vrcp): ~2^-12 rel. error, fine for inference.
        inv_l = pl.reciprocal(l_ref[...], approx=True)
        o_ref[...] = (acc_ref[...] * inv_l).astype(o_ref.dtype)


def attention_core(q, k, v, *, scale, max_head_group=8):
    BH, S, D = q.shape
    isz = q.dtype.itemsize

    # Head-group size: amortize per-step overhead for small head_dim, but keep
    # BH//G >= 2 so both v7x TensorCores get work on the parallel axes.
    g_cap = max(1, min(max_head_group, 512 // max(D, 1)))
    if BH >= 2:
        g_cap = min(g_cap, max(1, BH // 2))
    G = _largest_divisor_leq(BH, g_cap)

    def fp(tq, tkv):
        return (2 * (G * tq * D + 2 * G * tkv * D) * isz   # q + k + v, 2x buffered
                + 2 * G * tq * D * isz                     # output, 2x buffered
                + G * tq * (D + 2) * 4)                    # f32 acc + m + l scratch

    tq_c = _divisor_tiles(S, (512, 256, 128, 64, 32, 16, 8))
    tkv_c = _divisor_tiles(S, (512, 256, 128, 64, 32, 16, 8))
    cfgs = [(tq, tkv) for tq in tq_c for tkv in tkv_c]
    # Prefer large tq (K/V are re-streamed once per q tile), then large tkv.
    cfgs.sort(key=lambda c: (c[0], c[1]), reverse=True)
    tq, tkv = next((c for c in cfgs if fp(*c) <= _VMEM_BLOCK_BUDGET), cfgs[-1])

    n_q = S // tq
    cost = pl.CostEstimate(
        flops=4 * BH * S * S * D,                  # QK^T + PV
        transcendentals=BH * S * S,                # exp2
        bytes_accessed=(BH * S * D * isz           # Q read once
                        + 2 * BH * S * D * isz * n_q   # K/V re-streamed per q tile
                        + BH * S * D * isz))           # output

    kern = functools.partial(_flash_attn_kernel, scale_log2e=scale * _LOG2E)
    return pl.pallas_call(
        kern,
        out_shape=jax.ShapeDtypeStruct((BH, S, D), q.dtype),
        grid_spec=pltpu.PrefetchScalarGridSpec(
            num_scalar_prefetch=0,
            grid=(BH // G, n_q, S // tkv),
            in_specs=[
                pl.BlockSpec((G, tq, D), lambda g, qi, ki: (g, qi, 0)),
                pl.BlockSpec((G, tkv, D), lambda g, qi, ki: (g, ki, 0)),
                pl.BlockSpec((G, tkv, D), lambda g, qi, ki: (g, ki, 0)),
            ],
            out_specs=pl.BlockSpec((G, tq, D), lambda g, qi, ki: (g, qi, 0)),
            scratch_shapes=[
                pltpu.VMEM((G, tq, 1), jnp.float32),   # running max m (log2 domain)
                pltpu.VMEM((G, tq, 1), jnp.float32),   # running sum l
                pltpu.VMEM((G, tq, D), jnp.float32),   # accumulator
            ],
        ),
        compiler_params=pltpu.CompilerParams(
            dimension_semantics=("parallel", "parallel", "arbitrary"),
            vmem_limit_bytes=_vmem_limit_bytes(fp(tq, tkv))),
        cost_estimate=cost,
    )(q, k, v)


# --------------------------------------------------------------------------
# Full forward (glue reshapes in plain JAX, hot paths in Pallas).
#   Default compute_dtype=jnp.bfloat16: bf16 MXU operands with f32 accumulation
#   and f32 softmax math.  Pass compute_dtype=jnp.float32 for full precision.
# --------------------------------------------------------------------------
def parallel_attention(hidden_states, w_qkv, b_qkv, w_dense, b_dense,
                       num_heads, *, compute_dtype=jnp.bfloat16):
    s, b, h = hidden_states.shape
    hd = h // num_heads
    scale = 1.0 / math.sqrt(hd)

    qkv_dtype = compute_dtype if compute_dtype is not None else hidden_states.dtype

    x2d = hidden_states.reshape(s * b, h)
    mixed = linear(x2d, w_qkv, b_qkv,
                   out_dtype=qkv_dtype, compute_dtype=compute_dtype)
    mixed = mixed.reshape(s, b, num_heads, 3 * hd)

    q = mixed[..., 0 * hd:1 * hd]   # [s, b, nh, hd]
    k = mixed[..., 1 * hd:2 * hd]
    v = mixed[..., 2 * hd:3 * hd]

    def to_bh(t):  # [s, b, nh, hd] -> [b*nh, s, hd]
        return jnp.transpose(t, (1, 2, 0, 3)).reshape(b * num_heads, s, hd)

    ctx = attention_core(to_bh(q), to_bh(k), to_bh(v), scale=scale)  # [b*nh,s,hd]

    # [b*nh, s, hd] -> [b, nh, s, hd] -> permute(2,0,1,3) -> [s*b, h]
    ctx = ctx.reshape(b, num_heads, s, hd).transpose(2, 0, 1, 3).reshape(s * b, h)

    out = linear(ctx, w_dense, b_dense,
                 out_dtype=hidden_states.dtype,
                 compute_dtype=compute_dtype).reshape(s, b, h)
    # RowParallelLinear(skip_bias_add=False): bias already added; also return it
    # to mirror the (output, bias) tuple of the PyTorch module.
    return out, b_dense


# --------------------------------------------------------------------------
# Pure-JAX reference for correctness check.
# --------------------------------------------------------------------------
def parallel_attention_ref(x, w_qkv, b_qkv, w_dense, b_dense, num_heads):
    s, b, h = x.shape
    hd = h // num_heads
    mixed = (x.reshape(s * b, h) @ w_qkv + b_qkv).reshape(s, b, num_heads, 3 * hd)
    q, k, v = mixed[..., :hd], mixed[..., hd:2 * hd], mixed[..., 2 * hd:]
    q = jnp.transpose(q, (1, 2, 0, 3))
    k = jnp.transpose(k, (1, 2, 0, 3))
    v = jnp.transpose(v, (1, 2, 0, 3))
    scores = jnp.einsum("bhqd,bhkd->bhqk", q, k) / math.sqrt(hd)
    probs = jax.nn.softmax(scores, axis=-1)
    ctx = jnp.einsum("bhqk,bhkd->bhqd", probs, v)         # [b, nh, s, hd]
    ctx = jnp.transpose(ctx, (2, 0, 1, 3)).reshape(s, b, h)
    out = ctx.reshape(s * b, h) @ w_dense + b_dense
    return out.reshape(s, b, h)


if __name__ == "__main__":
    seq, batch, hidden, num_heads = 8, 2, 32, 4

    key = jax.random.PRNGKey(0)
    k1, k2, k3, k4, k5 = jax.random.split(key, 5)
    x = jax.random.normal(k1, (seq, batch, hidden), jnp.float32)
    w_qkv = jax.random.normal(k2, (hidden, 3 * hidden), jnp.float32) / math.sqrt(hidden)
    b_qkv = 0.02 * jax.random.normal(k3, (3 * hidden,), jnp.float32)
    w_dense = jax.random.normal(k4, (hidden, hidden), jnp.float32) / math.sqrt(hidden)
    b_dense = 0.02 * jax.random.normal(k5, (hidden,), jnp.float32)

    ref = parallel_attention_ref(x, w_qkv, b_qkv, w_dense, b_dense, num_heads)

    # f32 operand path: tight check (tolerance covers the approx EUP reciprocal).
    out_f32, bias = jax.block_until_ready(
        parallel_attention(x, w_qkv, b_qkv, w_dense, b_dense, num_heads,
                           compute_dtype=jnp.float32))
    assert out_f32.shape == (seq, batch, hidden)
    assert bias.shape == (hidden,)
    assert jnp.allclose(out_f32, ref, atol=5e-3, rtol=5e-3), "f32 path mismatch vs ref"

    # Default path: bf16 MXU operands, f32 accumulation / f32 softmax.
    out_bf16, _ = jax.block_until_ready(
        parallel_attention(x, w_qkv, b_qkv, w_dense, b_dense, num_heads))
    assert out_bf16.shape == (seq, batch, hidden)
    assert bool(jnp.all(jnp.isfinite(out_bf16)))
    assert float(jnp.max(jnp.abs(out_bf16.astype(jnp.float32) - ref))) < 0.25, \
        "bf16 path far off ref"

    # Also exercise the K-tiled accumulator fallback path of linear() (used when
    # the full-K weight stripe would not fit the VMEM budget).
    x2d = x.reshape(seq * batch, hidden)
    y_tiled = jax.block_until_ready(
        linear(x2d, w_qkv, b_qkv, out_dtype=jnp.float32,
               compute_dtype=jnp.float32, force_k_tiled=True))
    assert jnp.allclose(y_tiled, x2d @ w_qkv + b_qkv, atol=2e-3, rtol=2e-3), \
        "K-tiled linear mismatch vs ref"

    print("KERNEL_OK")
</pallas_src>

<mosaic_0001>
module attributes {stable_mosaic.version = 11 : i64} {
  func.func @_linear_wres_kernel(%arg0: i32, %arg1: i32, %arg2: memref<16x32xf32, #tpu.memory_space<vmem>>, %arg3: memref<32x96xf32, #tpu.memory_space<vmem>>, %arg4: memref<1x96xf32, #tpu.memory_space<vmem>>, %arg5: memref<16x96xf32, #tpu.memory_space<vmem>>) attributes {dimension_semantics = [#tpu.dimension_semantics<parallel>, #tpu.dimension_semantics<parallel>], iteration_bounds = array<i64: 1, 1>, scalar_prefetch = 0 : i64, scratch_operands = 0 : i64, tpu.core_type = #tpu.core_type<tc>, window_params = [{transform_indices = @transform_0, window_bounds = array<i64: 16, 32>}, {transform_indices = @transform_1, window_bounds = array<i64: 32, 96>}, {transform_indices = @transform_2, window_bounds = array<i64: 1, 96>}, {transform_indices = @transform_3, window_bounds = array<i64: 16, 96>}]} {
    %c0 = arith.constant 0 : index
    %c0_0 = arith.constant 0 : index
    %0 = vector.load %arg2[%c0, %c0_0] : memref<16x32xf32, #tpu.memory_space<vmem>>, vector<16x32xf32>
    %c0_1 = arith.constant 0 : index
    %c0_2 = arith.constant 0 : index
    %1 = vector.load %arg3[%c0_1, %c0_2] : memref<32x96xf32, #tpu.memory_space<vmem>>, vector<32x96xf32>
    %cst = arith.constant dense<0.000000e+00> : vector<16x96xf32>
    %2 = tpu.matmul %0, %1, %cst {dimension_numbers = #tpu.dot_dimension_numbers<[1], [0], [0], [1], [0, 0, 1, 1], [], []>} : vector<16x32xf32>, vector<32x96xf32>, vector<16x96xf32> -> vector<16x96xf32>
    %c0_3 = arith.constant 0 : index
    %c0_4 = arith.constant 0 : index
    %3 = vector.load %arg4[%c0_3, %c0_4] : memref<1x96xf32, #tpu.memory_space<vmem>>, vector<1x96xf32>
    %4 = vector.broadcast %3 : vector<1x96xf32> to vector<16x96xf32>
    %5 = arith.addf %2, %4 : vector<16x96xf32>
    %c0_5 = arith.constant 0 : index
    %c0_6 = arith.constant 0 : index
    %6 = vector.load %arg5[%c0_5, %c0_6] : memref<16x96xf32, #tpu.memory_space<vmem>>, vector<16x96xf32>
    tpu.vector_store %arg5[%c0_5, %c0_6], %5 {strides = array<i32>} : memref<16x96xf32, #tpu.memory_space<vmem>>, vector<16x96xf32>,
    return
  }
  func.func @transform_0(%arg0: i32, %arg1: i32) -> (i32, i32) {
    %c0_i32 = arith.constant 0 : i32
    %c0_i32_0 = arith.constant 0 : i32
    return %arg1, %c0_i32 : i32, i32
  }
  func.func @transform_1(%arg0: i32, %arg1: i32) -> (i32, i32) {
    %c0_i32 = arith.constant 0 : i32
    %c0_i32_0 = arith.constant 0 : i32
    return %c0_i32, %arg0 : i32, i32
  }
  func.func @transform_2(%arg0: i32, %arg1: i32) -> (i32, i32) {
    %c0_i32 = arith.constant 0 : i32
    %c0_i32_0 = arith.constant 0 : i32
    return %c0_i32, %arg0 : i32, i32
  }
  func.func @transform_3(%arg0: i32, %arg1: i32) -> (i32, i32) {
    %c0_i32 = arith.constant 0 : i32
    return %arg1, %arg0 : i32, i32
  }
}

</mosaic_0001>

<llo_original>
// kernel: tpu_custom_call.1
$region0: #{tpu_custom_call.1}
  #allocation0 [shape = 'u32[]', space=smem, size = 0x4, offset = 0x4, fixed_abs, tag = 'smem constant byte address 0x4 - core index']
  #allocation1 [shape = 'u32[144,128]{1,0:T(1,128)}', space=vmem, size = 0x12000, scoped, tag = 'internal scratch']
  %s0 = inlined_call_operand.hbm [shape: f32[16,32], index: 0, kind: input, shape index: {}]
  %s1 = inlined_call_operand.hbm [shape: f32[32,96], index: 1, kind: input, shape index: {}]
  %s2 = inlined_call_operand.vmem [shape: f32[1,96], index: 2, kind: input, shape index: {}]
  %s3 = inlined_call_operand.hbm [shape: f32[16,96], index: 3, kind: output, shape index: {}]
  %s4 = sld [smem:[#allocation0]]
  $region30: #{tpu_custom_call.1} parent=0
    _
  %s6 = ssub.s32 1, %s4
  %s7 = scalar_select 0, %s6, %s4
  $region1: #{tpu_custom_call.1} parent=0
    #allocation2 [shape = 'u8[8192]{0}', space=vmem, size = 0x2000, scoped, tag = 'input window, operand 0, single buffered']
    #allocation3 [shape = 's32[1]{0}', space=sflag, size = 0x4, scoped, tag = 'scoped memory for tpu_custom_call.1']
    #allocation4 [shape = 's32[1]{0}', space=sflag, size = 0x4, scoped, tag = 'scoped memory for tpu_custom_call.1']
    #allocation5 [shape = 'u8[16384]{0}', space=vmem, size = 0x4000, scoped, tag = 'input window, operand 1, single buffered']
    #allocation6 [shape = 's32[1]{0}', space=sflag, size = 0x4, scoped, tag = 'scoped memory for tpu_custom_call.1']
    #allocation7 [shape = 'u8[8192]{0}', space=vmem, size = 0x2000, scoped, tag = 'output window, operand 0, single buffered']
    %8 = vsyncpa [#allocation3], 0
    %9 = vsyncpa [#allocation6], 0
    %10 = vsyncpa [#allocation4], 0
    // Predicated region
    $region2: #{tpu_custom_call.1} parent=1 // pred_check
      _
    $region3: #{tpu_custom_call.1} parent=1 // pred_check_branch
      %12 = sbr.rel (0) target = $region5
    $region4: #{tpu_custom_call.1} parent=1 // pred_region
      %s14 = ssub.s32 256, 256
      %15 = vsyncadd [#allocation3], %s14
      %s16 = sshll.u32 [#allocation2], 4
      %s17 = int_to_ptr.vmem [resolvable:$true] %s16
      %22 = dma.hbm_to_vmem [thread:$0]  %s0, 256, %s17, [#allocation3], 128, 128, 8
    $region5: #{tpu_custom_call.1} parent=1 // pred_fallthru
      _
    // Predicated region
    $region6: #{tpu_custom_call.1} parent=1 // pred_check
      _
    $region7: #{tpu_custom_call.1} parent=1 // pred_check_branch
      %24 = sbr.rel (0) target = $region9
    $region8: #{tpu_custom_call.1} parent=1 // pred_region
      %s26 = ssub.s32 512, 512
      %27 = vsyncadd [#allocation6], %s26
      %s28 = sshll.u32 [#allocation5], 4
      %s29 = int_to_ptr.vmem [resolvable:$true] %s28
      %34 = dma.hbm_to_vmem [thread:$0]  %s1, 512, %s29, [#allocation6], 128, 128, 8
    $region9: #{tpu_custom_call.1} parent=1 // pred_fallthru
      _
    // Predicated region
    $region10: #{tpu_custom_call.1} parent=1 // pred_check
      _
    $region11: #{tpu_custom_call.1} parent=1 // pred_check_branch
      %36 = sbr.rel (0) target = $region13
    $region12: #{tpu_custom_call.1} parent=1 // pred_region
      _
    $region13: #{tpu_custom_call.1} parent=1 // pred_fallthru
      _
    // Predicated region
    $region14: #{tpu_custom_call.1} parent=1 // pred_check
      _
    $region15: #{tpu_custom_call.1} parent=1 // pred_check_branch
      %38 = sbr.rel (0) target = $region17
    $region16: #{tpu_custom_call.1} parent=1 // pred_region
      %39 = dma.done [#allocation3], 256
    $region17: #{tpu_custom_call.1} parent=1 // pred_fallthru
      _
    // Predicated region
    $region18: #{tpu_custom_call.1} parent=1 // pred_check
      _
    $region19: #{tpu_custom_call.1} parent=1 // pred_check_branch
      %41 = sbr.rel (0) target = $region21
    $region20: #{tpu_custom_call.1} parent=1 // pred_region
      %42 = dma.done [#allocation6], 512
    $region21: #{tpu_custom_call.1} parent=1 // pred_fallthru
      _
    %v43 = vld [vmem:[#allocation2] sm:$0xff]
    %v44 = vld [vmem:[#allocation2 + $0x8] sm:$0xff]
    %v45 = vld [vmem:[#allocation5] sm:$0xff]
    %v46 = vld [vmem:[#allocation5 + $0x8] sm:$0xff]
    %v47 = vld [vmem:[#allocation5 + $0x10] sm:$0xff]
    %v48 = vld [vmem:[#allocation5 + $0x18] sm:$0xff]
    %v49 = vld [vmem:[%s2] sm:$0x1]
    %v51 = vlaneseq
    %v52 = vshrl.u32 %v51, 7
    %v53 = vsub.s32 0, %v52
    %v54 = vrot.slane %v49, %v53
    %vm56 = vcmask 261120
    %v58 = vsel %vm56, %v43, 0
    %v61 = vsel %vm56, %v44, 0
    %63 = vmatprep.subr.mxu0 0.0
    %64 = vmatpush1.msra.mxu0 0.0
    %65 = vmatprep.subr.mxu0 0.0
    %66 = vmatpush1.msra.mxu0 0.0
    %67 = vmatprep.subr.mxu0 0.0
    %68 = vmatpush1.msra.mxu0 0.0
    %69 = vmatprep.subr.mxu0 0.0
    %70 = vmatpush1.msra.mxu0 0.0
    %71 = vmatprep.subr.mxu0 0.0
    %72 = vmatpush1.msra.mxu0 0.0
    %73 = vmatprep.subr.mxu0 0.0
    %74 = vmatpush1.msra.mxu0 0.0
    %75 = vmatprep.subr.mxu0 0.0
    %76 = vmatpush1.msra.mxu0 0.0
    %77 = vmatprep.subr.mxu0 0.0
    %78 = vmatpush1.msra.mxu0 0.0
    %79 = vmatprep.subr.mxu0 0.0
    %80 = vmatpush1.msra.mxu0 0.0
    %81 = vmatprep.subr.mxu0 0.0
    %82 = vmatpush1.msra.mxu0 0.0
    %83 = vmatprep.subr.mxu0 0.0
    %84 = vmatpush1.msra.mxu0 0.0
    %85 = vmatprep.subr.mxu0 0.0
    %86 = vmatpush1.msra.mxu0 0.0
    %87 = vmatprep.subr.mxu0 0.0
    %88 = vmatpush1.msra.mxu0 %v48
    %89 = vmatprep.subr.mxu0 0.0
    %90 = vmatpush1.msra.mxu0 %v47
    %91 = vmatprep.subr.mxu0 0.0
    %92 = vmatpush1.msra.mxu0 %v46
    %93 = vmatprep.subr.mxu0 0.0
    %94 = vmatpush1.msra.mxu0 %v45
    %95 = vmatprep.subr.mxu0 0.0
    %96 = vmatpush2.msra.mxu0 0.0
    %97 = vmatprep.subr.mxu0 0.0
    %98 = vmatpush2.msra.mxu0 0.0
    %99 = vmatprep.subr.mxu0 0.0
    %100 = vmatpush2.msra.mxu0 0.0
    %101 = vmatprep.subr.mxu0 0.0
    %102 = vmatpush2.msra.mxu0 0.0
    %103 = vmatprep.subr.mxu0 0.0
    %104 = vmatpush2.msra.mxu0 0.0
    %105 = vmatprep.subr.mxu0 0.0
    %106 = vmatpush2.msra.mxu0 0.0
    %107 = vmatprep.subr.mxu0 0.0
    %108 = vmatpush2.msra.mxu0 0.0
    %109 = vmatprep.subr.mxu0 0.0
    %110 = vmatpush2.msra.mxu0 0.0
    %111 = vmatprep.subr.mxu0 0.0
    %112 = vmatpush2.msra.mxu0 0.0
    %113 = vmatprep.subr.mxu0 0.0
    %114 = vmatpush2.msra.mxu0 0.0
    %115 = vmatprep.subr.mxu0 0.0
    %116 = vmatpush2.msra.mxu0 0.0
    %117 = vmatprep.subr.mxu0 0.0
    %118 = vmatpush2.msra.mxu0 0.0
    %119 = vmatprep.subr.mxu0 0.0
    %120 = vmatpush2.msra.mxu0 0.0
    %121 = vmatprep.subr.mxu0 0.0
    %122 = vmatpush2.msra.mxu0 0.0
    %123 = vmatprep.subr.mxu0 0.0
    %124 = vmatpush2.msra.mxu0 0.0
    %125 = vmatprep.subr.mxu0 0.0
    %126 = vmatpush2.msra.mxu0 0.0
    %127 = vmatprep.mubr.f32.mxu0 0.0
    %128 = vmatmul.mubr.f32.gmra.mxu0 %v58
    %v129 = vpop.f32.mrf.mxu0
    %v130 = vadd.f32 %v54, %v129
    %v131 = vpop.f32.mrf.mxu0
    %132 = vmatprep.mubr.f32.mxu0 0.0
    %133 = vmatmul.mubr.f32.gmra.mxu0 %v61
    %v134 = vpop.f32.mrf.mxu0
    %v135 = vadd.f32 %v54, %v134
    %v136 = vpop.f32.mrf.mxu0
    %137 = vdwg.mxu0
    %vm138 = vcmask 785408
    %139 = vst.msk [vmem:[#allocation7] sm:$0xff] %vm138, %v130
    %140 = vst.msk [vmem:[#allocation7 + $0x8] sm:$0xff] %vm138, %v135
    // Predicated region
    $region22: #{tpu_custom_call.1} parent=1 // pred_check
      _
    $region23: #{tpu_custom_call.1} parent=1 // pred_check_branch
      %142 = sbr.rel (0) target = $region25
    $region24: #{tpu_custom_call.1} parent=1 // pred_region
      %s144 = ssub.s32 256, 256
      %145 = vsyncadd [#allocation4], %s144
      %s146 = sshll.u32 [#allocation7], 4
      %s147 = int_to_ptr.vmem [resolvable:$true] %s146
      %152 = dma.vmem_to_hbm [thread:$0]  %s147, 256, %s3, [#allocation4], 128, 128, 8
    $region25: #{tpu_custom_call.1} parent=1 // pred_fallthru
      _
    // Predicated region
    $region26: #{tpu_custom_call.1} parent=1 // pred_check
      _
    $region27: #{tpu_custom_call.1} parent=1 // pred_check_branch
      %154 = sbr.rel (0) target = $region29
    $region28: #{tpu_custom_call.1} parent=1 // pred_region
      %155 = dma.done [#allocation4], 256
    $region29: #{tpu_custom_call.1} parent=1 // pred_fallthru
      _
    %156 = vsyncpa [#allocation3], 1
    %157 = vsyncpa [#allocation6], 1
    %158 = vsyncpa [#allocation4], 1

</llo_original>
